<compile_context>
chip_gen: v6e
topology: v6e:2x2x1
jax: 0.10.0
libtpu: 0.0.40
codegen_flags: <defaults>
</compile_context>

<pallas_src>
import jax
import jax.numpy as jnp
from jax.experimental import pallas as pl
from jax.experimental.pallas import tpu as pltpu

LANE = 128   # lane-padded feature width for every layer
H1 = 128     # first hidden width (already 128)
H2 = 64      # second hidden width (padded to LANE)


def policy_kernel(x_ref, w_ref, b_ref, o_ref):
    # x_ref : (block_b, 128) bf16   — batch tile, feature-padded
    # w_ref : (3, 128, 128) bf16    — [w1; w2; w3], each zero-padded to 128x128
    # b_ref : (3, 128)      f32     — [b1; b2; b3], zero-padded to 128 lanes
    # o_ref : (block_b, 128) f32    — lane-dense output tile (cols >= act_dim are 0)
    x = x_ref[...]

    # Layer 1: MXU matmul (bf16 in, f32 acc); bias + tanh in f32 (VPU/EUP).
    h1 = jnp.tanh(
        jnp.dot(x, w_ref[0], preferred_element_type=jnp.float32) + b_ref[0:1, :]
    )
    # Layer 2.
    h2 = jnp.tanh(
        jnp.dot(h1.astype(jnp.bfloat16), w_ref[1],
                preferred_element_type=jnp.float32) + b_ref[1:2, :]
    )
    # Layer 3 (no activation).
    out = (
        jnp.dot(h2.astype(jnp.bfloat16), w_ref[2],
                preferred_element_type=jnp.float32) + b_ref[2:3, :]
    )
    o_ref[...] = out.astype(o_ref.dtype)


def _round_up(x, m):
    return ((x + m - 1) // m) * m


def pack_params(params, state_dim, act_dim):
    """Pack all weights/biases into one padded bf16 weight slab and one f32 bias slab."""
    w = jnp.zeros((3, LANE, LANE), jnp.float32)
    w = w.at[0, :state_dim, :H1].set(params["w1"])
    w = w.at[1, :H1, :H2].set(params["w2"])
    w = w.at[2, :H2, :act_dim].set(params["w3"])
    b = jnp.zeros((3, LANE), jnp.float32)
    b = b.at[0, :H1].set(params["b1"].reshape(-1))
    b = b.at[1, :H2].set(params["b2"].reshape(-1))
    b = b.at[2, :act_dim].set(params["b3"].reshape(-1))
    return w.astype(jnp.bfloat16), b


def policy_forward(x, params, *, block_b=1024):
    """x: [B, state_dim] float32. params: dict of (pre-transposed) weights/biases."""
    B, state_dim = x.shape
    act_dim = params["w3"].shape[1]
    assert state_dim <= LANE and act_dim <= LANE

    w_slab, b_slab = pack_params(params, state_dim, act_dim)

    # Choose a batch tile (multiple of 8) and pad B up to a multiple of it.
    block_b = min(block_b, _round_up(B, 8))
    B_pad = _round_up(B, block_b)

    # Zero-pad batch rows and feature columns; stream bf16 (halves input HBM bytes).
    x_pad = jnp.pad(
        x.astype(jnp.bfloat16),
        ((0, B_pad - B), (0, LANE - state_dim)),
    )

    grid = (B_pad // block_b,)
    out = pl.pallas_call(
        policy_kernel,
        out_shape=jax.ShapeDtypeStruct((B_pad, LANE), jnp.float32),
        grid=grid,
        in_specs=[
            pl.BlockSpec((block_b, LANE), lambda i: (i, 0)),      # batch tile of x
            pl.BlockSpec((3, LANE, LANE), lambda i: (0, 0, 0)),   # resident weights
            pl.BlockSpec((3, LANE), lambda i: (0, 0)),            # resident biases
        ],
        out_specs=pl.BlockSpec((block_b, LANE), lambda i: (i, 0)),
        compiler_params=pltpu.CompilerParams(
            dimension_semantics=("parallel",),      # batch axis: shardable / pipelined
            vmem_limit_bytes=32 * 1024 * 1024,      # safe on v7x's 64 MiB physical VMEM
        ),
    )(x_pad, w_slab, b_slab)

    return out[:B, :act_dim]


def init_params(key, state_dim, act_dim):
    """Deterministic synthetic parameters (shapes match the PyTorch module)."""
    ks = jax.random.split(key, 6)
    # PyTorch nn.Linear stores weight as [out, in]; we pre-transpose to [in, out].
    w1 = jax.random.normal(ks[0], (state_dim, H1), jnp.float32) * 0.1
    b1 = jax.random.normal(ks[1], (H1,), jnp.float32) * 0.1
    w2 = jax.random.normal(ks[2], (H1, H2), jnp.float32) * 0.1
    b2 = jax.random.normal(ks[3], (H2,), jnp.float32) * 0.1
    w3 = jax.random.normal(ks[4], (H2, act_dim), jnp.float32) * 0.1
    b3 = jax.random.normal(ks[5], (act_dim,), jnp.float32) * 0.1
    return {"w1": w1, "b1": b1, "w2": w2, "b2": b2, "w3": w3, "b3": b3}


def policy_ref(x, p):
    h1 = jnp.tanh(x @ p["w1"] + p["b1"])
    h2 = jnp.tanh(h1 @ p["w2"] + p["b2"])
    return h2 @ p["w3"] + p["b3"]


if __name__ == "__main__":
    key = jax.random.PRNGKey(0)
    batch, state_dim, act_dim = 8, 32, 8

    kx, kp, kx2 = jax.random.split(key, 3)
    x = jax.random.normal(kx, (batch, state_dim), jnp.float32)
    params = init_params(kp, state_dim, act_dim)

    out = policy_forward(x, params)
    out = jax.block_until_ready(out)
    ref = policy_ref(x, params)
    assert out.shape == (batch, act_dim)
    # bf16 matmul operands (f32 accumulation) -> small deviation vs f32 reference.
    assert jnp.allclose(out, ref, atol=2e-2, rtol=2e-2), "mismatch vs JAX reference"

    # Exercise the multi-tile grid + batch-padding path with a non-aligned batch.
    x2 = jax.random.normal(kx2, (300, state_dim), jnp.float32)
    out2 = jax.block_until_ready(policy_forward(x2, params, block_b=128))
    ref2 = policy_ref(x2, params)
    assert out2.shape == (300, act_dim)
    assert jnp.allclose(out2, ref2, atol=2e-2, rtol=2e-2), "mismatch (tiled) vs reference"

    print("KERNEL_OK")
</pallas_src>

<mosaic_0001>
module attributes {stable_mosaic.version = 11 : i64} {
  func.func @policy_kernel(%arg0: i32, %arg1: memref<8x128xbf16, #tpu.memory_space<vmem>>, %arg2: memref<3x128x128xbf16, #tpu.memory_space<vmem>>, %arg3: memref<3x128xf32, #tpu.memory_space<vmem>>, %arg4: memref<8x128xf32, #tpu.memory_space<vmem>>) attributes {dimension_semantics = [#tpu.dimension_semantics<parallel>], iteration_bounds = array<i64: 1>, scalar_prefetch = 0 : i64, scratch_operands = 0 : i64, tpu.core_type = #tpu.core_type<tc>, window_params = [{transform_indices = @transform_0, window_bounds = array<i64: 8, 128>}, {pipeline_mode = #tpu.pipeline_mode<synchronous>, transform_indices = @transform_1, window_bounds = array<i64: 3, 128, 128>}, {pipeline_mode = #tpu.pipeline_mode<synchronous>, transform_indices = @transform_2, window_bounds = array<i64: 3, 128>}, {transform_indices = @transform_3, window_bounds = array<i64: 8, 128>}]} {
    %c0 = arith.constant 0 : index
    %c0_0 = arith.constant 0 : index
    %0 = vector.load %arg1[%c0, %c0_0] : memref<8x128xbf16, #tpu.memory_space<vmem>>, vector<8x128xbf16>
    %c0_1 = arith.constant 0 : index
    %c0_2 = arith.constant 0 : index
    %c0_3 = arith.constant 0 : index
    %1 = vector.load %arg2[%c0_1, %c0_2, %c0_3] : memref<3x128x128xbf16, #tpu.memory_space<vmem>>, vector<1x128x128xbf16>
    %2 = vector.shape_cast %1 : vector<1x128x128xbf16> to vector<128x128xbf16>
    %cst = arith.constant dense<0.000000e+00> : vector<8x128xf32>
    %3 = tpu.matmul %0, %2, %cst {dimension_numbers = #tpu.dot_dimension_numbers<[1], [0], [0], [1], [0, 0, 1, 1], [], []>} : vector<8x128xbf16>, vector<128x128xbf16>, vector<8x128xf32> -> vector<8x128xf32>
    %c0_4 = arith.constant 0 : index
    %c0_5 = arith.constant 0 : index
    %4 = vector.load %arg3[%c0_4, %c0_5] : memref<3x128xf32, #tpu.memory_space<vmem>>, vector<1x128xf32>
    %5 = vector.broadcast %4 : vector<1x128xf32> to vector<8x128xf32>
    %6 = arith.addf %3, %5 : vector<8x128xf32>
    %7 = math.tanh %6 : vector<8x128xf32>
    %8 = arith.truncf %7 : vector<8x128xf32> to vector<8x128xbf16>
    %c1 = arith.constant 1 : index
    %c0_6 = arith.constant 0 : index
    %c0_7 = arith.constant 0 : index
    %9 = vector.load %arg2[%c1, %c0_6, %c0_7] : memref<3x128x128xbf16, #tpu.memory_space<vmem>>, vector<1x128x128xbf16>
    %10 = vector.shape_cast %9 : vector<1x128x128xbf16> to vector<128x128xbf16>
    %cst_8 = arith.constant dense<0.000000e+00> : vector<8x128xf32>
    %11 = tpu.matmul %8, %10, %cst_8 {dimension_numbers = #tpu.dot_dimension_numbers<[1], [0], [0], [1], [0, 0, 1, 1], [], []>} : vector<8x128xbf16>, vector<128x128xbf16>, vector<8x128xf32> -> vector<8x128xf32>
    %c1_9 = arith.constant 1 : index
    %c0_10 = arith.constant 0 : index
    %12 = vector.load %arg3[%c1_9, %c0_10] : memref<3x128xf32, #tpu.memory_space<vmem>>, vector<1x128xf32>
    %13 = vector.broadcast %12 : vector<1x128xf32> to vector<8x128xf32>
    %14 = arith.addf %11, %13 : vector<8x128xf32>
    %15 = math.tanh %14 : vector<8x128xf32>
    %16 = arith.truncf %15 : vector<8x128xf32> to vector<8x128xbf16>
    %c2 = arith.constant 2 : index
    %c0_11 = arith.constant 0 : index
    %c0_12 = arith.constant 0 : index
    %17 = vector.load %arg2[%c2, %c0_11, %c0_12] : memref<3x128x128xbf16, #tpu.memory_space<vmem>>, vector<1x128x128xbf16>
    %18 = vector.shape_cast %17 : vector<1x128x128xbf16> to vector<128x128xbf16>
    %cst_13 = arith.constant dense<0.000000e+00> : vector<8x128xf32>
    %19 = tpu.matmul %16, %18, %cst_13 {dimension_numbers = #tpu.dot_dimension_numbers<[1], [0], [0], [1], [0, 0, 1, 1], [], []>} : vector<8x128xbf16>, vector<128x128xbf16>, vector<8x128xf32> -> vector<8x128xf32>
    %c2_14 = arith.constant 2 : index
    %c0_15 = arith.constant 0 : index
    %20 = vector.load %arg3[%c2_14, %c0_15] : memref<3x128xf32, #tpu.memory_space<vmem>>, vector<1x128xf32>
    %21 = vector.broadcast %20 : vector<1x128xf32> to vector<8x128xf32>
    %22 = arith.addf %19, %21 : vector<8x128xf32>
    %c0_16 = arith.constant 0 : index
    %c0_17 = arith.constant 0 : index
    %23 = vector.load %arg4[%c0_16, %c0_17] : memref<8x128xf32, #tpu.memory_space<vmem>>, vector<8x128xf32>
    tpu.vector_store %arg4[%c0_16, %c0_17], %22 {strides = array<i32>} : memref<8x128xf32, #tpu.memory_space<vmem>>, vector<8x128xf32>,
    return
  }
  func.func @transform_0(%arg0: i32) -> (i32, i32) {
    %c0_i32 = arith.constant 0 : i32
    %c0_i32_0 = arith.constant 0 : i32
    return %arg0, %c0_i32 : i32, i32
  }
  func.func @transform_1(%arg0: i32) -> (i32, i32, i32) {
    %c0_i32 = arith.constant 0 : i32
    %c0_i32_0 = arith.constant 0 : i32
    %c0_i32_1 = arith.constant 0 : i32
    %c0_i32_2 = arith.constant 0 : i32
    return %c0_i32, %c0_i32_0, %c0_i32_1 : i32, i32, i32
  }
  func.func @transform_2(%arg0: i32) -> (i32, i32) {
    %c0_i32 = arith.constant 0 : i32
    %c0_i32_0 = arith.constant 0 : i32
    %c0_i32_1 = arith.constant 0 : i32
    return %c0_i32, %c0_i32_0 : i32, i32
  }
  func.func @transform_3(%arg0: i32) -> (i32, i32) {
    %c0_i32 = arith.constant 0 : i32
    %c0_i32_0 = arith.constant 0 : i32
    return %arg0, %c0_i32 : i32, i32
  }
}

</mosaic_0001>

<llo_original>
// kernel: tpu_custom_call.1
$region0: #{tpu_custom_call.1}
  #allocation0 [shape = 'u32[]', space=smem, size = 0x4, offset = 0x4, fixed_abs, tag = 'smem constant byte address 0x4 - core index']
  #allocation1 [shape = 'u32[144,128]{1,0:T(1,128)}', space=vmem, size = 0x12000, scoped, tag = 'internal scratch']
  %s0 = inlined_call_operand.hbm [shape: bf16[8,128], index: 0, kind: input, shape index: {}]
  %s1 = inlined_call_operand.hbm [shape: bf16[3,128,128], index: 1, kind: input, shape index: {}]
  %s2 = inlined_call_operand.hbm [shape: f32[3,128], index: 2, kind: input, shape index: {}]
  %s3 = inlined_call_operand.hbm [shape: f32[8,128], index: 3, kind: output, shape index: {}]
  %s4 = sld [smem:[#allocation0]]
  $region34: #{tpu_custom_call.1} parent=0
    _
  %s6 = ssub.s32 1, %s4
  %s7 = scalar_select 0, %s6, %s4
  $region1: #{tpu_custom_call.1} parent=0
    #allocation2 [shape = 'u8[2048]{0}', space=vmem, size = 0x800, scoped, tag = 'input window, operand 0, single buffered']
    #allocation3 [shape = 's32[1]{0}', space=sflag, size = 0x4, scoped, tag = 'scoped memory for tpu_custom_call.1']
    #allocation4 [shape = 's32[1]{0}', space=sflag, size = 0x4, scoped, tag = 'scoped memory for tpu_custom_call.1']
    #allocation5 [shape = 'u8[98304]{0}', space=vmem, size = 0x18000, scoped, tag = 'input window, operand 1, single buffered']
    #allocation6 [shape = 's32[1]{0}', space=sflag, size = 0x4, scoped, tag = 'scoped memory for tpu_custom_call.1']
    #allocation7 [shape = 'u8[2048]{0}', space=vmem, size = 0x800, scoped, tag = 'input window, operand 2, single buffered']
    #allocation8 [shape = 'u8[4096]{0}', space=vmem, size = 0x1000, scoped, tag = 'output window, operand 0, single buffered']
    %8 = vsyncpa [#allocation3], 0
    %9 = vsyncpa [#allocation6], 0
    %10 = vsyncpa [#allocation4], 0
    // Predicated region
    $region2: #{tpu_custom_call.1} parent=1 // pred_check
      _
    $region3: #{tpu_custom_call.1} parent=1 // pred_check_branch
      %12 = sbr.rel (0) target = $region5
    $region4: #{tpu_custom_call.1} parent=1 // pred_region
      %s14 = ssub.s32 64, 64
      %15 = vsyncadd [#allocation3], %s14
      %s17 = sshll.u32 [#allocation2], 4
      %s18 = int_to_ptr.vmem [resolvable:$true] %s17
      %20 = dma.hbm_to_vmem [thread:$0]  %s0, 64, %s18, [#allocation3]
    $region5: #{tpu_custom_call.1} parent=1 // pred_fallthru
      _
    // Predicated region
    $region6: #{tpu_custom_call.1} parent=1 // pred_check
      _
    $region7: #{tpu_custom_call.1} parent=1 // pred_check_branch
      %22 = sbr.rel (0) target = $region9
    $region8: #{tpu_custom_call.1} parent=1 // pred_region
      %s24 = ssub.s32 3072, 3072
      %25 = vsyncadd [#allocation6], %s24
      %s26 = sshll.u32 [#allocation5], 4
      %s27 = int_to_ptr.vmem [resolvable:$true] %s26
      %32 = dma.hbm_to_vmem [thread:$0]  %s1, 3072, %s27, [#allocation6], 64, 64, 4
    $region9: #{tpu_custom_call.1} parent=1 // pred_fallthru
      _
    // Predicated region
    $region10: #{tpu_custom_call.1} parent=1 // pred_check
      _
    $region11: #{tpu_custom_call.1} parent=1 // pred_check_branch
      %34 = sbr.rel (0) target = $region13
    $region12: #{tpu_custom_call.1} parent=1 // pred_region
      %s36 = ssub.s32 64, 64
      %37 = vsyncadd [#allocation6], %s36
      %s39 = sshll.u32 [#allocation7], 4
      %s40 = int_to_ptr.vmem [resolvable:$true] %s39
      %42 = dma.hbm_to_vmem [thread:$0]  %s2, 64, %s40, [#allocation6]
    $region13: #{tpu_custom_call.1} parent=1 // pred_fallthru
      _
    // Predicated region
    $region14: #{tpu_custom_call.1} parent=1 // pred_check
      _
    $region15: #{tpu_custom_call.1} parent=1 // pred_check_branch
      %44 = sbr.rel (0) target = $region17
    $region16: #{tpu_custom_call.1} parent=1 // pred_region
      %45 = dma.done [#allocation3], 64
    $region17: #{tpu_custom_call.1} parent=1 // pred_fallthru
      _
    // Predicated region
    $region18: #{tpu_custom_call.1} parent=1 // pred_check
      _
    $region19: #{tpu_custom_call.1} parent=1 // pred_check_branch
      %47 = sbr.rel (0) target = $region21
    $region20: #{tpu_custom_call.1} parent=1 // pred_region
      %48 = dma.done [#allocation6], 3072
    $region21: #{tpu_custom_call.1} parent=1 // pred_fallthru
      _
    // Predicated region
    $region22: #{tpu_custom_call.1} parent=1 // pred_check
      _
    $region23: #{tpu_custom_call.1} parent=1 // pred_check_branch
      %50 = sbr.rel (0) target = $region25
    $region24: #{tpu_custom_call.1} parent=1 // pred_region
      %51 = dma.done [#allocation6], 64
    $region25: #{tpu_custom_call.1} parent=1 // pred_fallthru
      _
    %v53 = vld [vmem:[#allocation2] sm:$0xf]
    %v54 = vld [vmem:[#allocation5] sm:$0xf]
    %v55 = vld [vmem:[#allocation5 + $0x4] sm:$0xf]
    %v56 = vld [vmem:[#allocation5 + $0x8] sm:$0xf]
    %v57 = vld [vmem:[#allocation5 + $0xc] sm:$0xf]
    %v58 = vld [vmem:[#allocation5 + $0x10] sm:$0xf]
    %v59 = vld [vmem:[#allocation5 + $0x14] sm:$0xf]
    %v60 = vld [vmem:[#allocation5 + $0x18] sm:$0xf]
    %v61 = vld [vmem:[#allocation5 + $0x1c] sm:$0xf]
    %v62 = vld [vmem:[#allocation5 + $0x20] sm:$0xf]
    %v63 = vld [vmem:[#allocation5 + $0x24] sm:$0xf]
    %v64 = vld [vmem:[#allocation5 + $0x28] sm:$0xf]
    %v65 = vld [vmem:[#allocation5 + $0x2c] sm:$0xf]
    %v66 = vld [vmem:[#allocation5 + $0x30] sm:$0xf]
    %v67 = vld [vmem:[#allocation5 + $0x34] sm:$0xf]
    %v68 = vld [vmem:[#allocation5 + $0x38] sm:$0xf]
    %v69 = vld [vmem:[#allocation5 + $0x3c] sm:$0xf]
    %v70 = vld [vmem:[#allocation7] sm:$0x1]
    %v71 = vlaneseq
    %v72 = vshrl.u32 %v71, 7
    %v73 = vsub.s32 0, %v72
    %v74 = vrot.slane %v70, %v73
    %v91 = vunpack.c.l.b16 %v54
    %v92 = vunpack.c.l.b16 %v55
    %v93 = vunpack.c.l.b16 %v56
    %v94 = vunpack.c.l.b16 %v57
    %v95 = vunpack.c.l.b16 %v58
    %v96 = vunpack.c.l.b16 %v59
    %v97 = vunpack.c.l.b16 %v60
    %v98 = vunpack.c.l.b16 %v61
    %v99 = vunpack.c.l.b16 %v62
    %v100 = vunpack.c.l.b16 %v63
    %v101 = vunpack.c.l.b16 %v64
    %v102 = vunpack.c.l.b16 %v65
    %v103 = vunpack.c.l.b16 %v66
    %v104 = vunpack.c.l.b16 %v67
    %v105 = vunpack.c.l.b16 %v68
    %v106 = vunpack.c.l.b16 %v69
    %v107 = vpack.c.b16 %v92, %v91
    %v108 = vpack.c.b16 %v94, %v93
    %v109 = vpack.c.b16 %v96, %v95
    %v110 = vpack.c.b16 %v98, %v97
    %v111 = vpack.c.b16 %v100, %v99
    %v112 = vpack.c.b16 %v102, %v101
    %v113 = vpack.c.b16 %v104, %v103
    %v114 = vpack.c.b16 %v106, %v105
    %123 = vmatprep.subr.bf16.mxu0 0
    %124 = vmatpush1.bf16.msra.mxu0 %v114
    %125 = vmatprep.subr.bf16.mxu0 0
    %126 = vmatpush1.bf16.msra.mxu0 %v113
    %127 = vmatprep.subr.bf16.mxu0 0
    %128 = vmatpush1.bf16.msra.mxu0 %v112
    %129 = vmatprep.subr.bf16.mxu0 0
    %130 = vmatpush1.bf16.msra.mxu0 %v111
    %131 = vmatprep.subr.bf16.mxu0 0
    %132 = vmatpush1.bf16.msra.mxu0 %v110
    %133 = vmatprep.subr.bf16.mxu0 0
    %134 = vmatpush1.bf16.msra.mxu0 %v109
    %135 = vmatprep.subr.bf16.mxu0 0
    %136 = vmatpush1.bf16.msra.mxu0 %v108
    %137 = vmatprep.subr.bf16.mxu0 0
    %138 = vmatpush1.bf16.msra.mxu0 %v107
    %139 = vmatprep.subr.bf16.mxu0 0
    %140 = vmatpush2.bf16.msra.mxu0 0
    %141 = vmatprep.subr.bf16.mxu0 0
    %142 = vmatpush2.bf16.msra.mxu0 0
    %143 = vmatprep.subr.bf16.mxu0 0
    %144 = vmatpush2.bf16.msra.mxu0 0
    %145 = vmatprep.subr.bf16.mxu0 0
    %146 = vmatpush2.bf16.msra.mxu0 0
    %147 = vmatprep.subr.bf16.mxu0 0
    %148 = vmatpush2.bf16.msra.mxu0 0
    %149 = vmatprep.subr.bf16.mxu0 0
    %150 = vmatpush2.bf16.msra.mxu0 0
    %151 = vmatprep.subr.bf16.mxu0 0
    %152 = vmatpush2.bf16.msra.mxu0 0
    %153 = vmatprep.subr.bf16.mxu0 0
    %154 = vmatpush2.bf16.msra.mxu0 0
    %155 = vmatprep.mubr.bf16.mxu0 0
    %156 = vmatmul.mubr.bf16.gmra.mxu0 %v53
    %v157 = vpop.f32.mrf.mxu0
    %v158 = vadd.f32 %v74, %v157
    %v159 = vpop.f32.mrf.mxu0
    %v160 = vpop.f32.mrf.mxu0
    %v161 = vpop.f32.mrf.mxu0
    %162 = vdwg.mxu0
    %v163 = vtanh.pop %v158
    %v164 = vpack.c.bf16 %v163, %v163
    %s165 = scalar_lea.vmem [#allocation5], 64
    %v166 = vld [vmem:[%s165] sm:$0xf]
    %v167 = vld [vmem:[%s165 + $0x4] sm:$0xf]
    %v168 = vld [vmem:[%s165 + $0x8] sm:$0xf]
    %v169 = vld [vmem:[%s165 + $0xc] sm:$0xf]
    %v170 = vld [vmem:[%s165 + $0x10] sm:$0xf]
    %v171 = vld [vmem:[%s165 + $0x14] sm:$0xf]
    %v172 = vld [vmem:[%s165 + $0x18] sm:$0xf]
    %v173 = vld [vmem:[%s165 + $0x1c] sm:$0xf]
    %v174 = vld [vmem:[%s165 + $0x20] sm:$0xf]
    %v175 = vld [vmem:[%s165 + $0x24] sm:$0xf]
    %v176 = vld [vmem:[%s165 + $0x28] sm:$0xf]
    %v177 = vld [vmem:[%s165 + $0x2c] sm:$0xf]
    %v178 = vld [vmem:[%s165 + $0x30] sm:$0xf]
    %v179 = vld [vmem:[%s165 + $0x34] sm:$0xf]
    %v180 = vld [vmem:[%s165 + $0x38] sm:$0xf]
    %v181 = vld [vmem:[%s165 + $0x3c] sm:$0xf]
    %v182 = vld [vmem:[#allocation7 + $0x1] sm:$0x1]
    %v183 = vlaneseq
    %v184 = vshrl.u32 %v183, 7
    %v185 = vsub.s32 0, %v184
    %v186 = vrot.slane %v182, %v185
    %v203 = vunpack.c.l.b16 %v166
    %v204 = vunpack.c.l.b16 %v167
    %v205 = vunpack.c.l.b16 %v168
    %v206 = vunpack.c.l.b16 %v169
    %v207 = vunpack.c.l.b16 %v170
    %v208 = vunpack.c.l.b16 %v171
    %v209 = vunpack.c.l.b16 %v172
    %v210 = vunpack.c.l.b16 %v173
    %v211 = vunpack.c.l.b16 %v174
    %v212 = vunpack.c.l.b16 %v175
    %v213 = vunpack.c.l.b16 %v176
    %v214 = vunpack.c.l.b16 %v177
    %v215 = vunpack.c.l.b16 %v178
    %v216 = vunpack.c.l.b16 %v179
    %v217 = vunpack.c.l.b16 %v180
    %v218 = vunpack.c.l.b16 %v181
    %v219 = vpack.c.b16 %v204, %v203
    %v220 = vpack.c.b16 %v206, %v205
    %v221 = vpack.c.b16 %v208, %v207
    %v222 = vpack.c.b16 %v210, %v209
    %v223 = vpack.c.b16 %v212, %v211
    %v224 = vpack.c.b16 %v214, %v213
    %v225 = vpack.c.b16 %v216, %v215
    %v226 = vpack.c.b16 %v218, %v217
    %235 = vmatprep.subr.bf16.mxu0 0
    %236 = vmatpush1.bf16.msra.mxu0 %v226
    %237 = vmatprep.subr.bf16.mxu0 0
    %238 = vmatpush1.bf16.msra.mxu0 %v225
    %239 = vmatprep.subr.bf16.mxu0 0
    %240 = vmatpush1.bf16.msra.mxu0 %v224
    %241 = vmatprep.subr.bf16.mxu0 0
    %242 = vmatpush1.bf16.msra.mxu0 %v223
    %243 = vmatprep.subr.bf16.mxu0 0
    %244 = vmatpush1.bf16.msra.mxu0 %v222
    %245 = vmatprep.subr.bf16.mxu0 0
    %246 = vmatpush1.bf16.msra.mxu0 %v221
    %247 = vmatprep.subr.bf16.mxu0 0
    %248 = vmatpush1.bf16.msra.mxu0 %v220
    %249 = vmatprep.subr.bf16.mxu0 0
    %250 = vmatpush1.bf16.msra.mxu0 %v219
    %251 = vmatprep.subr.bf16.mxu0 0
    %252 = vmatpush2.bf16.msra.mxu0 0
    %253 = vmatprep.subr.bf16.mxu0 0
    %254 = vmatpush2.bf16.msra.mxu0 0
    %255 = vmatprep.subr.bf16.mxu0 0
    %256 = vmatpush2.bf16.msra.mxu0 0
    %257 = vmatprep.subr.bf16.mxu0 0
    %258 = vmatpush2.bf16.msra.mxu0 0
    %259 = vmatprep.subr.bf16.mxu0 0
    %260 = vmatpush2.bf16.msra.mxu0 0
    %261 = vmatprep.subr.bf16.mxu0 0
    %262 = vmatpush2.bf16.msra.mxu0 0
    %263 = vmatprep.subr.bf16.mxu0 0
    %264 = vmatpush2.bf16.msra.mxu0 0
    %265 = vmatprep.subr.bf16.mxu0 0
    %266 = vmatpush2.bf16.msra.mxu0 0
    %267 = vmatprep.mubr.bf16.mxu0 0
    %268 = vmatmul.mubr.bf16.gmra.mxu0 %v164
    %v269 = vpop.f32.mrf.mxu0
    %v270 = vadd.f32 %v186, %v269
    %v271 = vpop.f32.mrf.mxu0
    %v272 = vpop.f32.mrf.mxu0
    %v273 = vpop.f32.mrf.mxu0
    %274 = vdwg.mxu0
    %v275 = vtanh.pop %v270
    %v276 = vpack.c.bf16 %v275, %v275
    %s277 = scalar_lea.vmem [#allocation5], 128
    %v278 = vld [vmem:[%s277] sm:$0xf]
    %v279 = vld [vmem:[%s277 + $0x4] sm:$0xf]
    %v280 = vld [vmem:[%s277 + $0x8] sm:$0xf]
    %v281 = vld [vmem:[%s277 + $0xc] sm:$0xf]
    %v282 = vld [vmem:[%s277 + $0x10] sm:$0xf]
    %v283 = vld [vmem:[%s277 + $0x14] sm:$0xf]
    %v284 = vld [vmem:[%s277 + $0x18] sm:$0xf]
    %v285 = vld [vmem:[%s277 + $0x1c] sm:$0xf]
    %v286 = vld [vmem:[%s277 + $0x20] sm:$0xf]
    %v287 = vld [vmem:[%s277 + $0x24] sm:$0xf]
    %v288 = vld [vmem:[%s277 + $0x28] sm:$0xf]
    %v289 = vld [vmem:[%s277 + $0x2c] sm:$0xf]
    %v290 = vld [vmem:[%s277 + $0x30] sm:$0xf]
    %v291 = vld [vmem:[%s277 + $0x34] sm:$0xf]
    %v292 = vld [vmem:[%s277 + $0x38] sm:$0xf]
    %v293 = vld [vmem:[%s277 + $0x3c] sm:$0xf]
    %v294 = vld [vmem:[#allocation7 + $0x2] sm:$0x1]
    %v295 = vlaneseq
    %v296 = vshrl.u32 %v295, 7
    %v297 = vsub.s32 0, %v296
    %v298 = vrot.slane %v294, %v297
    %v315 = vunpack.c.l.b16 %v278
    %v316 = vunpack.c.l.b16 %v279
    %v317 = vunpack.c.l.b16 %v280
    %v318 = vunpack.c.l.b16 %v281
    %v319 = vunpack.c.l.b16 %v282
    %v320 = vunpack.c.l.b16 %v283
    %v321 = vunpack.c.l.b16 %v284
    %v322 = vunpack.c.l.b16 %v285
    %v323 = vunpack.c.l.b16 %v286
    %v324 = vunpack.c.l.b16 %v287
    %v325 = vunpack.c.l.b16 %v288
    %v326 = vunpack.c.l.b16 %v289
    %v327 = vunpack.c.l.b16 %v290
    %v328 = vunpack.c.l.b16 %v291
    %v329 = vunpack.c.l.b16 %v292
    %v330 = vunpack.c.l.b16 %v293
    %v331 = vpack.c.b16 %v316, %v315
    %v332 = vpack.c.b16 %v318, %v317
    %v333 = vpack.c.b16 %v320, %v319
    %v334 = vpack.c.b16 %v322, %v321
    %v335 = vpack.c.b16 %v324, %v323
    %v336 = vpack.c.b16 %v326, %v325
    %v337 = vpack.c.b16 %v328, %v327
    %v338 = vpack.c.b16 %v330, %v329
    %347 = vmatprep.subr.bf16.mxu0 0
    %348 = vmatpush1.bf16.msra.mxu0 %v338
    %349 = vmatprep.subr.bf16.mxu0 0
    %350 = vmatpush1.bf16.msra.mxu0 %v337
    %351 = vmatprep.subr.bf16.mxu0 0
    %352 = vmatpush1.bf16.msra.mxu0 %v336
    %353 = vmatprep.subr.bf16.mxu0 0
    %354 = vmatpush1.bf16.msra.mxu0 %v335
    %355 = vmatprep.subr.bf16.mxu0 0
    %356 = vmatpush1.bf16.msra.mxu0 %v334
    %357 = vmatprep.subr.bf16.mxu0 0
    %358 = vmatpush1.bf16.msra.mxu0 %v333
    %359 = vmatprep.subr.bf16.mxu0 0
    %360 = vmatpush1.bf16.msra.mxu0 %v332
    %361 = vmatprep.subr.bf16.mxu0 0
    %362 = vmatpush1.bf16.msra.mxu0 %v331
    %363 = vmatprep.subr.bf16.mxu0 0
    %364 = vmatpush2.bf16.msra.mxu0 0
    %365 = vmatprep.subr.bf16.mxu0 0
    %366 = vmatpush2.bf16.msra.mxu0 0
    %367 = vmatprep.subr.bf16.mxu0 0
    %368 = vmatpush2.bf16.msra.mxu0 0
    %369 = vmatprep.subr.bf16.mxu0 0
    %370 = vmatpush2.bf16.msra.mxu0 0
    %371 = vmatprep.subr.bf16.mxu0 0
    %372 = vmatpush2.bf16.msra.mxu0 0
    %373 = vmatprep.subr.bf16.mxu0 0
    %374 = vmatpush2.bf16.msra.mxu0 0
    %375 = vmatprep.subr.bf16.mxu0 0
    %376 = vmatpush2.bf16.msra.mxu0 0
    %377 = vmatprep.subr.bf16.mxu0 0
    %378 = vmatpush2.bf16.msra.mxu0 0
    %379 = vmatprep.mubr.bf16.mxu0 0
    %380 = vmatmul.mubr.bf16.gmra.mxu0 %v276
    %v381 = vpop.f32.mrf.mxu0
    %v382 = vadd.f32 %v298, %v381
    %v383 = vpop.f32.mrf.mxu0
    %v384 = vpop.f32.mrf.mxu0
    %v385 = vpop.f32.mrf.mxu0
    %386 = vdwg.mxu0
    %387 = vst [vmem:[#allocation8] sm:$0xff] %v382
    // Predicated region
    $region26: #{tpu_custom_call.1} parent=1 // pred_check
      _
    $region27: #{tpu_custom_call.1} parent=1 // pred_check_branch
      %389 = sbr.rel (0) target = $region29
    $region28: #{tpu_custom_call.1} parent=1 // pred_region
      %s391 = ssub.s32 128, 128
      %392 = vsyncadd [#allocation4], %s391
      %s394 = sshll.u32 [#allocation8], 4
      %s395 = int_to_ptr.vmem [resolvable:$true] %s394
      %397 = dma.vmem_to_hbm [thread:$0]  %s395, 128, %s3, [#allocation4]
    $region29: #{tpu_custom_call.1} parent=1 // pred_fallthru
      _
    // Predicated region
    $region30: #{tpu_custom_call.1} parent=1 // pred_check
      _
    $region31: #{tpu_custom_call.1} parent=1 // pred_check_branch
      %399 = sbr.rel (0) target = $region33
    $region32: #{tpu_custom_call.1} parent=1 // pred_region
      %400 = dma.done [#allocation4], 128
    $region33: #{tpu_custom_call.1} parent=1 // pred_fallthru
      _
    %401 = vsyncpa [#allocation3], 1
    %402 = vsyncpa [#allocation6], 1
    %403 = vsyncpa [#allocation4], 1

</llo_original>
